<compile_context>
chip_gen: v5e
topology: v5e:2x2
jax: 0.10.0
libtpu: 0.0.40
codegen_flags: <defaults>
</compile_context>

<pallas_src>
import functools

import numpy as np
import jax
import jax.numpy as jnp
from jax import lax
from jax.experimental import pallas as pl
from jax.experimental.pallas import tpu as pltpu

PRIMITIVES = [
    "none",
    "max_pool_3x3",
    "avg_pool_3x3",
    "skip_connect",
    "sep_conv_3x3",
    "sep_conv_5x5",
    "dil_conv_3x3",
    "dil_conv_5x5",
]

_BN_EPS = 1e-5
_BN_SCALE = float(1.0 / np.sqrt(1.0 + _BN_EPS))   # BN(affine=False), eval, default stats
_NEG = float(np.finfo(np.float32).min)


# ----------------------------------------------------------------------------
# Fused cell kernel (one grid step == one batch tile)
# Layout: states are (batch_tile*C, H*W) -> sublanes = channels, lanes = pixels.
# ----------------------------------------------------------------------------
def _make_cell_kernel(op_ids, steps, multiplier, btile, cin0, cin1, h, w, c):
    lanes = h * w          # flattened image, lane axis (e.g. 256 = 2 lane tiles)
    rc = btile * c         # rows of every intermediate state

    def kernel(wts_ref, s0_ref, s1_ref, wb0_ref, wb1_ref, out_ref):
        # ---- hoisted boundary masks + avg-pool divisor (built ONCE, in-kernel,
        #      from iota; nothing is captured as an array constant) -------------
        p = lax.broadcasted_iota(jnp.int32, (rc, lanes), 1)   # pixel id = hh*W + ww
        wi = p % w
        m_wl = wi > 0              # tap from (w-1) is valid
        m_wr = wi < w - 1          # tap from (w+1) is valid
        m_hu = p >= w              # tap from (h-1) is valid
        m_hd = p < lanes - w       # tap from (h+1) is valid
        cw = 1.0 + m_wl.astype(jnp.float32) + m_wr.astype(jnp.float32)
        ch = 1.0 + m_hu.astype(jnp.float32) + m_hd.astype(jnp.float32)
        inv_cnt = 1.0 / (cw * ch)  # count_include_pad=False divisor

        def _tap(x, d):
            # _tap(x, d)[:, p] == x[:, p + d] (circular across the lane axis).
            # Wrapped lanes are always masked by the m_* masks above.
            # (pltpu.roll(x, (-d) % lanes, axis=1) is a drop-in XLU equivalent.)
            return jnp.roll(x, -d, axis=1)

        def max_pool(x):   # 3x3, stride 1, pad 1 (separable)
            xl = jnp.where(m_wl, _tap(x, -1), _NEG)
            xr = jnp.where(m_wr, _tap(x, 1), _NEG)
            r = jnp.maximum(jnp.maximum(xl, x), xr)
            ru = jnp.where(m_hu, _tap(r, -w), _NEG)
            rd = jnp.where(m_hd, _tap(r, w), _NEG)
            return jnp.maximum(jnp.maximum(ru, r), rd)

        def avg_pool(x):   # 3x3, stride 1, pad 1, count_include_pad=False
            xl = jnp.where(m_wl, _tap(x, -1), 0.0)
            xr = jnp.where(m_wr, _tap(x, 1), 0.0)
            r = xl + x + xr
            ru = jnp.where(m_hu, _tap(r, -w), 0.0)
            rd = jnp.where(m_hd, _tap(r, w), 0.0)
            return (ru + r + rd) * inv_cnt

        # ---- preprocess0/1: ReLU -> 1x1 conv -> BN(affine=False, eval) --------
        # One MXU matmul each: block-diag(batch_tile copies of W^T) @ activations.
        x0 = jnp.maximum(s0_ref[...].reshape(btile * cin0, lanes), 0.0)
        st0 = jnp.dot(wb0_ref[...], x0,
                      preferred_element_type=jnp.float32) * _BN_SCALE   # (rc, lanes)
        x1 = jnp.maximum(s1_ref[...].reshape(btile * cin1, lanes), 0.0)
        st1 = jnp.dot(wb1_ref[...], x1,
                      preferred_element_type=jnp.float32) * _BN_SCALE   # (rc, lanes)

        states = [st0, st1]
        pooled = {}     # (state index, primitive) -> pooled value (trace-time memo)
        offset = 0
        for _ in range(steps):
            acc = None
            for j, hst in enumerate(states):
                name = PRIMITIVES[op_ids[offset + j]]
                if name == "none":
                    continue            # Zero op: weights * 0 contributes nothing
                if name == "skip_connect":
                    val = hst
                elif name in ("max_pool_3x3", "avg_pool_3x3"):
                    memo_key = (j, name)
                    if memo_key not in pooled:
                        pooled[memo_key] = (max_pool(hst) if name == "max_pool_3x3"
                                            else avg_pool(hst))
                    val = pooled[memo_key]
                else:
                    # TODO(synk): sep_conv_*/dil_conv_* primitives not implemented.
                    raise NotImplementedError(name)
                term = wts_ref[offset + j] * val        # scalar edge weight from SMEM
                acc = term if acc is None else acc + term
            if acc is None:             # every incoming edge selected 'none'
                acc = states[0] * 0.0
            offset += len(states)
            states.append(acc)

        # ---- channel concat of the last `multiplier` states: one dense store --
        out = jnp.concatenate(
            [st.reshape(btile, c, lanes) for st in states[-multiplier:]], axis=1)
        out_ref[...] = out.astype(out_ref.dtype)

    return kernel


# ----------------------------------------------------------------------------
# Wrapper-side helpers
# ----------------------------------------------------------------------------
def _block_diag_batched(wmat, reps):
    """1x1-conv weight (Cin, C) -> (reps*C, reps*Cin) block-diagonal LHS (W^T blocks)."""
    wt = jnp.asarray(wmat, jnp.float32).T                 # (C, Cin)
    eye = jnp.eye(reps, dtype=jnp.float32)
    big = eye[:, None, :, None] * wt[None, :, None, :]    # (reps, C, reps, Cin)
    return big.reshape(reps * wt.shape[0], reps * wt.shape[1])


def _pick_batch_tile(n, max_tile=8):
    """Largest batch tile <= max_tile dividing n while keeping grid length >= 2 (v7x)."""
    best = 1
    for b in range(1, min(max_tile, n) + 1):
        if n % b == 0 and (n // b >= 2 or n == 1):
            best = b
    return best


# ----------------------------------------------------------------------------
# SD_Cell forward (normal cell)
# ----------------------------------------------------------------------------
@functools.partial(jax.jit,
                   static_argnames=("net_rand", "steps", "multiplier", "batch_tile"))
def sd_cell_forward(s0_nchw, s1_nchw, weights, w_pre0, w_pre1,
                    net_rand, steps=4, multiplier=4, batch_tile=None):
    """s0/s1: NCHW float32; weights: (num_edges,) scalars; returns NCHW."""
    n, cin0, h, w = s0_nchw.shape
    cin1 = s1_nchw.shape[1]
    c = w_pre0.shape[1]
    lanes = h * w

    btile = _pick_batch_tile(n) if batch_tile is None else batch_tile
    assert n % btile == 0, (n, btile)

    # NCHW-native: only free trailing-dim reshapes, no transposes, no extra HBM pass.
    s0 = s0_nchw.astype(jnp.float32).reshape(n, cin0, lanes)
    s1 = s1_nchw.astype(jnp.float32).reshape(n, cin1, lanes)

    wb0 = _block_diag_batched(w_pre0, btile)   # (btile*C, btile*Cin0)
    wb1 = _block_diag_batched(w_pre1, btile)   # (btile*C, btile*Cin1)

    kernel = _make_cell_kernel(tuple(net_rand), steps, multiplier,
                               btile, cin0, cin1, h, w, c)

    out = pl.pallas_call(
        kernel,
        out_shape=jax.ShapeDtypeStruct((n, multiplier * c, lanes), jnp.float32),
        grid=(n // btile,),
        in_specs=[
            pl.BlockSpec(memory_space=pltpu.MemorySpace.SMEM),           # edge weights
            pl.BlockSpec((btile, cin0, lanes), lambda i: (i, 0, 0)),     # s0 (NCHW-flat)
            pl.BlockSpec((btile, cin1, lanes), lambda i: (i, 0, 0)),     # s1 (NCHW-flat)
            pl.BlockSpec((btile * c, btile * cin0), lambda i: (0, 0)),   # block-diag W0^T
            pl.BlockSpec((btile * c, btile * cin1), lambda i: (0, 0)),   # block-diag W1^T
        ],
        out_specs=pl.BlockSpec((btile, multiplier * c, lanes), lambda i: (i, 0, 0)),
        compiler_params=pltpu.CompilerParams(
            dimension_semantics=("parallel",),
        ),
    )(weights.astype(jnp.float32), s0, s1, wb0, wb1)

    # (N, multiplier*C, H*W) -> (N, multiplier*C, H, W): free reshape, no transpose.
    return out.reshape(n, multiplier * c, h, w)


# ----------------------------------------------------------------------------
# Pure-JAX reference (same assumptions) for correctness checking
# ----------------------------------------------------------------------------
def _ref_cell(s0_nchw, s1_nchw, weights, w_pre0, w_pre1, net_rand, steps, multiplier):
    def relu_conv_bn(x, wmat):
        x = jnp.maximum(x, 0.0)
        y = jnp.einsum("nihw,ic->nchw", x, wmat, precision=lax.Precision.HIGHEST)
        return y * _BN_SCALE

    def max_pool(x):
        _, _, hh, ww = x.shape
        xp = jnp.pad(x, ((0, 0), (0, 0), (1, 1), (1, 1)), constant_values=_NEG)
        taps = [xp[:, :, dy:dy + hh, dx:dx + ww] for dy in range(3) for dx in range(3)]
        return jnp.max(jnp.stack(taps), axis=0)

    def avg_pool(x):
        _, _, hh, ww = x.shape
        xp = jnp.pad(x, ((0, 0), (0, 0), (1, 1), (1, 1)))
        s = sum(xp[:, :, dy:dy + hh, dx:dx + ww] for dy in range(3) for dx in range(3))
        ones = jnp.pad(jnp.ones((1, 1, hh, ww), jnp.float32),
                       ((0, 0), (0, 0), (1, 1), (1, 1)))
        cnt = sum(ones[:, :, dy:dy + hh, dx:dx + ww] for dy in range(3) for dx in range(3))
        return s / cnt

    s0 = relu_conv_bn(s0_nchw.astype(jnp.float32), w_pre0)
    s1 = relu_conv_bn(s1_nchw.astype(jnp.float32), w_pre1)
    states = [s0, s1]
    offset = 0
    for _ in range(steps):
        acc = jnp.zeros_like(s0)
        for j, hst in enumerate(states):
            name = PRIMITIVES[net_rand[offset + j]]
            if name == "none":
                continue
            if name == "skip_connect":
                val = hst
            elif name == "max_pool_3x3":
                val = max_pool(hst)
            elif name == "avg_pool_3x3":
                val = avg_pool(hst)
            else:
                raise NotImplementedError(name)
            acc = acc + weights[offset + j] * val
        offset += len(states)
        states.append(acc)
    return jnp.concatenate(states[-multiplier:], axis=1)


if __name__ == "__main__":
    key = jax.random.PRNGKey(0)
    k1, k2, k3, k4, k5 = jax.random.split(key, 5)

    # small shapes consistent with the module
    N, C_prev_prev, C_prev, C, H, W = 2, 16, 16, 8, 16, 16
    steps, multiplier = 4, 4
    num_edges = sum(2 + i for i in range(steps))  # 14

    # deterministic op selection (only pool / skip / none primitives)
    net_rand = (3, 1, 2, 3, 0, 1, 3, 2, 0, 3, 2, 1, 0, 3)
    assert len(net_rand) == num_edges

    s0 = jax.random.normal(k1, (N, C_prev_prev, H, W), jnp.float32)
    s1 = jax.random.normal(k2, (N, C_prev, H, W), jnp.float32)
    weights = jax.random.uniform(k3, (num_edges,), jnp.float32)

    # preprocess 1x1 conv weights (PyTorch (C, Cin, 1, 1) -> (Cin, C) matrix)
    w_pre0 = 0.1 * jax.random.normal(k4, (C_prev_prev, C), jnp.float32)
    w_pre1 = 0.1 * jax.random.normal(k5, (C_prev, C), jnp.float32)

    out = sd_cell_forward(s0, s1, weights, w_pre0, w_pre1,
                          net_rand=net_rand, steps=steps, multiplier=multiplier)
    out = jax.block_until_ready(out)
    assert out.shape == (N, multiplier * C, H, W), out.shape
    assert bool(jnp.all(jnp.isfinite(out)))

    ref = jax.block_until_ready(
        _ref_cell(s0, s1, weights, w_pre0, w_pre1, net_rand, steps, multiplier))
    err = float(jnp.max(jnp.abs(out - ref)))
    assert err < 1e-2, f"max abs err vs reference: {err}"

    print("KERNEL_OK")
</pallas_src>

<mosaic_0001>
module attributes {stable_mosaic.version = 11 : i64} {
  func.func @kernel(%arg0: i32, %arg1: memref<14xf32, #tpu.memory_space<smem>>, %arg2: memref<1x16x256xf32, #tpu.memory_space<vmem>>, %arg3: memref<1x16x256xf32, #tpu.memory_space<vmem>>, %arg4: memref<8x16xf32, #tpu.memory_space<vmem>>, %arg5: memref<8x16xf32, #tpu.memory_space<vmem>>, %arg6: memref<1x32x256xf32, #tpu.memory_space<vmem>>) attributes {dimension_semantics = [#tpu.dimension_semantics<parallel>], iteration_bounds = array<i64: 2>, scalar_prefetch = 0 : i64, scratch_operands = 0 : i64, tpu.core_type = #tpu.core_type<tc>, window_params = [{transform_indices = @transform_0, window_bounds = array<i64: 14>}, {transform_indices = @transform_1, window_bounds = array<i64: 1, 16, 256>}, {transform_indices = @transform_2, window_bounds = array<i64: 1, 16, 256>}, {pipeline_mode = #tpu.pipeline_mode<synchronous>, transform_indices = @transform_3, window_bounds = array<i64: 8, 16>}, {pipeline_mode = #tpu.pipeline_mode<synchronous>, transform_indices = @transform_4, window_bounds = array<i64: 8, 16>}, {transform_indices = @transform_5, window_bounds = array<i64: 1, 32, 256>}]} {
    %0 = tpu.iota {dimensions = array<i32: 1>} : vector<8x256xi32>
    %c16_i32 = arith.constant 16 : i32
    %c0_i32 = arith.constant 0 : i32
    %1 = arith.cmpi eq, %c16_i32, %c0_i32 : i32
    %c1_i32 = arith.constant 1 : i32
    %2 = arith.select %1, %c1_i32, %c16_i32 : i32
    %3 = vector.broadcast %2 : i32 to vector<8x256xi32>
    %4 = arith.remsi %0, %3 : vector<8x256xi32>
    %c0_i32_0 = arith.constant 0 : i32
    %5 = vector.broadcast %c0_i32_0 : i32 to vector<8x256xi32>
    %6 = arith.cmpi ne, %4, %5 : vector<8x256xi32>
    %c0_i32_1 = arith.constant 0 : i32
    %7 = vector.broadcast %c0_i32_1 : i32 to vector<8x256xi32>
    %8 = arith.cmpi slt, %4, %7 : vector<8x256xi32>
    %c0_i32_2 = arith.constant 0 : i32
    %9 = arith.cmpi slt, %2, %c0_i32_2 : i32
    %10 = vector.broadcast %9 : i1 to vector<8x256xi1>
    %11 = vector.broadcast %10 : vector<8x256xi1> to vector<8x256xi1>
    %12 = arith.xori %8, %11 : vector<8x256xi1>
    %13 = arith.andi %12, %6 : vector<8x256xi1>
    %14 = vector.broadcast %2 : i32 to vector<8x256xi32>
    %15 = arith.addi %4, %14 : vector<8x256xi32>
    %16 = arith.select %13, %15, %4 : vector<8x256xi1>, vector<8x256xi32>
    %c0_i32_3 = arith.constant 0 : i32
    %17 = vector.broadcast %c0_i32_3 : i32 to vector<8x256xi32>
    %18 = arith.cmpi sgt, %16, %17 : vector<8x256xi32>
    %c15_i32 = arith.constant 15 : i32
    %19 = vector.broadcast %c15_i32 : i32 to vector<8x256xi32>
    %20 = arith.cmpi slt, %16, %19 : vector<8x256xi32>
    %c16_i32_4 = arith.constant 16 : i32
    %21 = vector.broadcast %c16_i32_4 : i32 to vector<8x256xi32>
    %22 = arith.cmpi sge, %0, %21 : vector<8x256xi32>
    %c240_i32 = arith.constant 240 : i32
    %23 = vector.broadcast %c240_i32 : i32 to vector<8x256xi32>
    %24 = arith.cmpi slt, %0, %23 : vector<8x256xi32>
    %25 = arith.extui %18 : vector<8x256xi1> to vector<8x256xi32>
    %26 = arith.sitofp %25 : vector<8x256xi32> to vector<8x256xf32>
    %cst = arith.constant 1.000000e+00 : f32
    %27 = vector.broadcast %cst : f32 to vector<8x256xf32>
    %28 = arith.addf %27, %26 : vector<8x256xf32>
    %29 = arith.extui %20 : vector<8x256xi1> to vector<8x256xi32>
    %30 = arith.sitofp %29 : vector<8x256xi32> to vector<8x256xf32>
    %31 = arith.addf %28, %30 : vector<8x256xf32>
    %32 = arith.extui %22 : vector<8x256xi1> to vector<8x256xi32>
    %33 = arith.sitofp %32 : vector<8x256xi32> to vector<8x256xf32>
    %cst_5 = arith.constant 1.000000e+00 : f32
    %34 = vector.broadcast %cst_5 : f32 to vector<8x256xf32>
    %35 = arith.addf %34, %33 : vector<8x256xf32>
    %36 = arith.extui %24 : vector<8x256xi1> to vector<8x256xi32>
    %37 = arith.sitofp %36 : vector<8x256xi32> to vector<8x256xf32>
    %38 = arith.addf %35, %37 : vector<8x256xf32>
    %39 = arith.mulf %31, %38 : vector<8x256xf32>
    %cst_6 = arith.constant 1.000000e+00 : f32
    %40 = vector.broadcast %cst_6 : f32 to vector<8x256xf32>
    %41 = arith.divf %40, %39 : vector<8x256xf32>
    %c0 = arith.constant 0 : index
    %c0_7 = arith.constant 0 : index
    %c0_8 = arith.constant 0 : index
    %42 = vector.load %arg2[%c0, %c0_7, %c0_8] : memref<1x16x256xf32, #tpu.memory_space<vmem>>, vector<1x16x256xf32>
    %43 = vector.shape_cast %42 : vector<1x16x256xf32> to vector<16x256xf32>
    %cst_9 = arith.constant 0.000000e+00 : f32
    %44 = vector.broadcast %cst_9 : f32 to vector<16x256xf32>
    %45 = arith.maximumf %43, %44 : vector<16x256xf32>
    %c0_10 = arith.constant 0 : index
    %c0_11 = arith.constant 0 : index
    %46 = vector.load %arg4[%c0_10, %c0_11] : memref<8x16xf32, #tpu.memory_space<vmem>>, vector<8x16xf32>
    %cst_12 = arith.constant dense<0.000000e+00> : vector<8x256xf32>
    %47 = tpu.matmul %46, %45, %cst_12 {dimension_numbers = #tpu.dot_dimension_numbers<[1], [0], [0], [1], [0, 0, 1, 1], [], []>} : vector<8x16xf32>, vector<16x256xf32>, vector<8x256xf32> -> vector<8x256xf32>
    %cst_13 = arith.constant 0.999994993 : f32
    %48 = vector.broadcast %cst_13 : f32 to vector<8x256xf32>
    %49 = arith.mulf %47, %48 : vector<8x256xf32>
    %c0_14 = arith.constant 0 : index
    %c0_15 = arith.constant 0 : index
    %c0_16 = arith.constant 0 : index
    %50 = vector.load %arg3[%c0_14, %c0_15, %c0_16] : memref<1x16x256xf32, #tpu.memory_space<vmem>>, vector<1x16x256xf32>
    %51 = vector.shape_cast %50 : vector<1x16x256xf32> to vector<16x256xf32>
    %cst_17 = arith.constant 0.000000e+00 : f32
    %52 = vector.broadcast %cst_17 : f32 to vector<16x256xf32>
    %53 = arith.maximumf %51, %52 : vector<16x256xf32>
    %c0_18 = arith.constant 0 : index
    %c0_19 = arith.constant 0 : index
    %54 = vector.load %arg5[%c0_18, %c0_19] : memref<8x16xf32, #tpu.memory_space<vmem>>, vector<8x16xf32>
    %cst_20 = arith.constant dense<0.000000e+00> : vector<8x256xf32>
    %55 = tpu.matmul %54, %53, %cst_20 {dimension_numbers = #tpu.dot_dimension_numbers<[1], [0], [0], [1], [0, 0, 1, 1], [], []>} : vector<8x16xf32>, vector<16x256xf32>, vector<8x256xf32> -> vector<8x256xf32>
    %cst_21 = arith.constant 0.999994993 : f32
    %56 = vector.broadcast %cst_21 : f32 to vector<8x256xf32>
    %57 = arith.mulf %55, %56 : vector<8x256xf32>
    %c0_22 = arith.constant 0 : index
    %58 = memref.load %arg1[%c0_22] : memref<14xf32, #tpu.memory_space<smem>>
    %59 = vector.broadcast %58 : f32 to vector<8x256xf32>
    %60 = arith.mulf %59, %49 : vector<8x256xf32>
    %61 = vector.extract_strided_slice %57 {offsets = [0, 255], sizes = [8, 1], strides = [1, 1]} : vector<8x256xf32> to vector<8x1xf32>
    %62 = vector.extract_strided_slice %57 {offsets = [0, 0], sizes = [8, 255], strides = [1, 1]} : vector<8x256xf32> to vector<8x255xf32>
    %63 = tpu.concatenate %61, %62 in 1 : vector<8x1xf32>, vector<8x255xf32> -> vector<8x256xf32>
    %cst_23 = arith.constant -3.40282347E+38 : f32
    %64 = vector.broadcast %cst_23 : f32 to vector<8x256xf32>
    %65 = arith.select %18, %63, %64 : vector<8x256xi1>, vector<8x256xf32>
    %66 = vector.extract_strided_slice %57 {offsets = [0, 1], sizes = [8, 255], strides = [1, 1]} : vector<8x256xf32> to vector<8x255xf32>
    %67 = vector.extract_strided_slice %57 {offsets = [0, 0], sizes = [8, 1], strides = [1, 1]} : vector<8x256xf32> to vector<8x1xf32>
    %68 = tpu.concatenate %66, %67 in 1 : vector<8x255xf32>, vector<8x1xf32> -> vector<8x256xf32>
    %cst_24 = arith.constant -3.40282347E+38 : f32
    %69 = vector.broadcast %cst_24 : f32 to vector<8x256xf32>
    %70 = arith.select %20, %68, %69 : vector<8x256xi1>, vector<8x256xf32>
    %71 = arith.maximumf %65, %57 : vector<8x256xf32>
    %72 = arith.maximumf %71, %70 : vector<8x256xf32>
    %73 = vector.extract_strided_slice %72 {offsets = [0, 240], sizes = [8, 16], strides = [1, 1]} : vector<8x256xf32> to vector<8x16xf32>
    %74 = vector.extract_strided_slice %72 {offsets = [0, 0], sizes = [8, 240], strides = [1, 1]} : vector<8x256xf32> to vector<8x240xf32>
    %75 = tpu.concatenate %73, %74 in 1 : vector<8x16xf32>, vector<8x240xf32> -> vector<8x256xf32>
    %cst_25 = arith.constant -3.40282347E+38 : f32
    %76 = vector.broadcast %cst_25 : f32 to vector<8x256xf32>
    %77 = arith.select %22, %75, %76 : vector<8x256xi1>, vector<8x256xf32>
    %78 = vector.extract_strided_slice %72 {offsets = [0, 16], sizes = [8, 240], strides = [1, 1]} : vector<8x256xf32> to vector<8x240xf32>
    %79 = vector.extract_strided_slice %72 {offsets = [0, 0], sizes = [8, 16], strides = [1, 1]} : vector<8x256xf32> to vector<8x16xf32>
    %80 = tpu.concatenate %78, %79 in 1 : vector<8x240xf32>, vector<8x16xf32> -> vector<8x256xf32>
    %cst_26 = arith.constant -3.40282347E+38 : f32
    %81 = vector.broadcast %cst_26 : f32 to vector<8x256xf32>
    %82 = arith.select %24, %80, %81 : vector<8x256xi1>, vector<8x256xf32>
    %83 = arith.maximumf %77, %72 : vector<8x256xf32>
    %84 = arith.maximumf %83, %82 : vector<8x256xf32>
    %c1 = arith.constant 1 : index
    %85 = memref.load %arg1[%c1] : memref<14xf32, #tpu.memory_space<smem>>
    %86 = vector.broadcast %85 : f32 to vector<8x256xf32>
    %87 = arith.mulf %86, %84 : vector<8x256xf32>
    %88 = arith.addf %60, %87 : vector<8x256xf32>
    %89 = vector.extract_strided_slice %49 {offsets = [0, 255], sizes = [8, 1], strides = [1, 1]} : vector<8x256xf32> to vector<8x1xf32>
    %90 = vector.extract_strided_slice %49 {offsets = [0, 0], sizes = [8, 255], strides = [1, 1]} : vector<8x256xf32> to vector<8x255xf32>
    %91 = tpu.concatenate %89, %90 in 1 : vector<8x1xf32>, vector<8x255xf32> -> vector<8x256xf32>
    %cst_27 = arith.constant 0.000000e+00 : f32
    %92 = vector.broadcast %cst_27 : f32 to vector<8x256xf32>
    %93 = arith.select %18, %91, %92 : vector<8x256xi1>, vector<8x256xf32>
    %94 = vector.extract_strided_slice %49 {offsets = [0, 1], sizes = [8, 255], strides = [1, 1]} : vector<8x256xf32> to vector<8x255xf32>
    %95 = vector.extract_strided_slice %49 {offsets = [0, 0], sizes = [8, 1], strides = [1, 1]} : vector<8x256xf32> to vector<8x1xf32>
    %96 = tpu.concatenate %94, %95 in 1 : vector<8x255xf32>, vector<8x1xf32> -> vector<8x256xf32>
    %cst_28 = arith.constant 0.000000e+00 : f32
    %97 = vector.broadcast %cst_28 : f32 to vector<8x256xf32>
    %98 = arith.select %20, %96, %97 : vector<8x256xi1>, vector<8x256xf32>
    %99 = arith.addf %93, %49 : vector<8x256xf32>
    %100 = arith.addf %99, %98 : vector<8x256xf32>
    %101 = vector.extract_strided_slice %100 {offsets = [0, 240], sizes = [8, 16], strides = [1, 1]} : vector<8x256xf32> to vector<8x16xf32>
    %102 = vector.extract_strided_slice %100 {offsets = [0, 0], sizes = [8, 240], strides = [1, 1]} : vector<8x256xf32> to vector<8x240xf32>
    %103 = tpu.concatenate %101, %102 in 1 : vector<8x16xf32>, vector<8x240xf32> -> vector<8x256xf32>
    %cst_29 = arith.constant 0.000000e+00 : f32
    %104 = vector.broadcast %cst_29 : f32 to vector<8x256xf32>
    %105 = arith.select %22, %103, %104 : vector<8x256xi1>, vector<8x256xf32>
    %106 = vector.extract_strided_slice %100 {offsets = [0, 16], sizes = [8, 240], strides = [1, 1]} : vector<8x256xf32> to vector<8x240xf32>
    %107 = vector.extract_strided_slice %100 {offsets = [0, 0], sizes = [8, 16], strides = [1, 1]} : vector<8x256xf32> to vector<8x16xf32>
    %108 = tpu.concatenate %106, %107 in 1 : vector<8x240xf32>, vector<8x16xf32> -> vector<8x256xf32>
    %cst_30 = arith.constant 0.000000e+00 : f32
    %109 = vector.broadcast %cst_30 : f32 to vector<8x256xf32>
    %110 = arith.select %24, %108, %109 : vector<8x256xi1>, vector<8x256xf32>
    %111 = arith.addf %105, %100 : vector<8x256xf32>
    %112 = arith.addf %111, %110 : vector<8x256xf32>
    %113 = arith.mulf %112, %41 : vector<8x256xf32>
    %c2 = arith.constant 2 : index
    %114 = memref.load %arg1[%c2] : memref<14xf32, #tpu.memory_space<smem>>
    %115 = vector.broadcast %114 : f32 to vector<8x256xf32>
    %116 = arith.mulf %115, %113 : vector<8x256xf32>
    %c3 = arith.constant 3 : index
    %117 = memref.load %arg1[%c3] : memref<14xf32, #tpu.memory_space<smem>>
    %118 = vector.broadcast %117 : f32 to vector<8x256xf32>
    %119 = arith.mulf %118, %57 : vector<8x256xf32>
    %120 = arith.addf %116, %119 : vector<8x256xf32>
    %121 = vector.extract_strided_slice %49 {offsets = [0, 255], sizes = [8, 1], strides = [1, 1]} : vector<8x256xf32> to vector<8x1xf32>
    %122 = vector.extract_strided_slice %49 {offsets = [0, 0], sizes = [8, 255], strides = [1, 1]} : vector<8x256xf32> to vector<8x255xf32>
    %123 = tpu.concatenate %121, %122 in 1 : vector<8x1xf32>, vector<8x255xf32> -> vector<8x256xf32>
    %cst_31 = arith.constant -3.40282347E+38 : f32
    %124 = vector.broadcast %cst_31 : f32 to vector<8x256xf32>
    %125 = arith.select %18, %123, %124 : vector<8x256xi1>, vector<8x256xf32>
    %126 = vector.extract_strided_slice %49 {offsets = [0, 1], sizes = [8, 255], strides = [1, 1]} : vector<8x256xf32> to vector<8x255xf32>
    %127 = vector.extract_strided_slice %49 {offsets = [0, 0], sizes = [8, 1], strides = [1, 1]} : vector<8x256xf32> to vector<8x1xf32>
    %128 = tpu.concatenate %126, %127 in 1 : vector<8x255xf32>, vector<8x1xf32> -> vector<8x256xf32>
    %cst_32 = arith.constant -3.40282347E+38 : f32
    %129 = vector.broadcast %cst_32 : f32 to vector<8x256xf32>
    %130 = arith.select %20, %128, %129 : vector<8x256xi1>, vector<8x256xf32>
    %131 = arith.maximumf %125, %49 : vector<8x256xf32>
    %132 = arith.maximumf %131, %130 : vector<8x256xf32>
    %133 = vector.extract_strided_slice %132 {offsets = [0, 240], sizes = [8, 16], strides = [1, 1]} : vector<8x256xf32> to vector<8x16xf32>
    %134 = vector.extract_strided_slice %132 {offsets = [0, 0], sizes = [8, 240], strides = [1, 1]} : vector<8x256xf32> to vector<8x240xf32>
    %135 = tpu.concatenate %133, %134 in 1 : vector<8x16xf32>, vector<8x240xf32> -> vector<8x256xf32>
    %cst_33 = arith.constant -3.40282347E+38 : f32
    %136 = vector.broadcast %cst_33 : f32 to vector<8x256xf32>
    %137 = arith.select %22, %135, %136 : vector<8x256xi1>, vector<8x256xf32>
    %138 = vector.extract_strided_slice %132 {offsets = [0, 16], sizes = [8, 240], strides = [1, 1]} : vector<8x256xf32> to vector<8x240xf32>
    %139 = vector.extract_strided_slice %132 {offsets = [0, 0], sizes = [8, 16], strides = [1, 1]} : vector<8x256xf32> to vector<8x16xf32>
    %140 = tpu.concatenate %138, %139 in 1 : vector<8x240xf32>, vector<8x16xf32> -> vector<8x256xf32>
    %cst_34 = arith.constant -3.40282347E+38 : f32
    %141 = vector.broadcast %cst_34 : f32 to vector<8x256xf32>
    %142 = arith.select %24, %140, %141 : vector<8x256xi1>, vector<8x256xf32>
    %143 = arith.maximumf %137, %132 : vector<8x256xf32>
    %144 = arith.maximumf %143, %142 : vector<8x256xf32>
    %c5 = arith.constant 5 : index
    %145 = memref.load %arg1[%c5] : memref<14xf32, #tpu.memory_space<smem>>
    %146 = vector.broadcast %145 : f32 to vector<8x256xf32>
    %147 = arith.mulf %146, %144 : vector<8x256xf32>
    %c6 = arith.constant 6 : index
    %148 = memref.load %arg1[%c6] : memref<14xf32, #tpu.memory_space<smem>>
    %149 = vector.broadcast %148 : f32 to vector<8x256xf32>
    %150 = arith.mulf %149, %57 : vector<8x256xf32>
    %151 = arith.addf %147, %150 : vector<8x256xf32>
    %152 = vector.extract_strided_slice %88 {offsets = [0, 255], sizes = [8, 1], strides = [1, 1]} : vector<8x256xf32> to vector<8x1xf32>
    %153 = vector.extract_strided_slice %88 {offsets = [0, 0], sizes = [8, 255], strides = [1, 1]} : vector<8x256xf32> to vector<8x255xf32>
    %154 = tpu.concatenate %152, %153 in 1 : vector<8x1xf32>, vector<8x255xf32> -> vector<8x256xf32>
    %cst_35 = arith.constant 0.000000e+00 : f32
    %155 = vector.broadcast %cst_35 : f32 to vector<8x256xf32>
    %156 = arith.select %18, %154, %155 : vector<8x256xi1>, vector<8x256xf32>
    %157 = vector.extract_strided_slice %88 {offsets = [0, 1], sizes = [8, 255], strides = [1, 1]} : vector<8x256xf32> to vector<8x255xf32>
    %158 = vector.extract_strided_slice %88 {offsets = [0, 0], sizes = [8, 1], strides = [1, 1]} : vector<8x256xf32> to vector<8x1xf32>
    %159 = tpu.concatenate %157, %158 in 1 : vector<8x255xf32>, vector<8x1xf32> -> vector<8x256xf32>
    %cst_36 = arith.constant 0.000000e+00 : f32
    %160 = vector.broadcast %cst_36 : f32 to vector<8x256xf32>
    %161 = arith.select %20, %159, %160 : vector<8x256xi1>, vector<8x256xf32>
    %162 = arith.addf %156, %88 : vector<8x256xf32>
    %163 = arith.addf %162, %161 : vector<8x256xf32>
    %164 = vector.extract_strided_slice %163 {offsets = [0, 240], sizes = [8, 16], strides = [1, 1]} : vector<8x256xf32> to vector<8x16xf32>
    %165 = vector.extract_strided_slice %163 {offsets = [0, 0], sizes = [8, 240], strides = [1, 1]} : vector<8x256xf32> to vector<8x240xf32>
    %166 = tpu.concatenate %164, %165 in 1 : vector<8x16xf32>, vector<8x240xf32> -> vector<8x256xf32>
    %cst_37 = arith.constant 0.000000e+00 : f32
    %167 = vector.broadcast %cst_37 : f32 to vector<8x256xf32>
    %168 = arith.select %22, %166, %167 : vector<8x256xi1>, vector<8x256xf32>
    %169 = vector.extract_strided_slice %163 {offsets = [0, 16], sizes = [8, 240], strides = [1, 1]} : vector<8x256xf32> to vector<8x240xf32>
    %170 = vector.extract_strided_slice %163 {offsets = [0, 0], sizes = [8, 16], strides = [1, 1]} : vector<8x256xf32> to vector<8x16xf32>
    %171 = tpu.concatenate %169, %170 in 1 : vector<8x240xf32>, vector<8x16xf32> -> vector<8x256xf32>
    %cst_38 = arith.constant 0.000000e+00 : f32
    %172 = vector.broadcast %cst_38 : f32 to vector<8x256xf32>
    %173 = arith.select %24, %171, %172 : vector<8x256xi1>, vector<8x256xf32>
    %174 = arith.addf %168, %163 : vector<8x256xf32>
    %175 = arith.addf %174, %173 : vector<8x256xf32>
    %176 = arith.mulf %175, %41 : vector<8x256xf32>
    %c7 = arith.constant 7 : index
    %177 = memref.load %arg1[%c7] : memref<14xf32, #tpu.memory_space<smem>>
    %178 = vector.broadcast %177 : f32 to vector<8x256xf32>
    %179 = arith.mulf %178, %176 : vector<8x256xf32>
    %180 = arith.addf %151, %179 : vector<8x256xf32>
    %c9 = arith.constant 9 : index
    %181 = memref.load %arg1[%c9] : memref<14xf32, #tpu.memory_space<smem>>
    %182 = vector.broadcast %181 : f32 to vector<8x256xf32>
    %183 = arith.mulf %182, %49 : vector<8x256xf32>
    %184 = vector.extract_strided_slice %57 {offsets = [0, 255], sizes = [8, 1], strides = [1, 1]} : vector<8x256xf32> to vector<8x1xf32>
    %185 = vector.extract_strided_slice %57 {offsets = [0, 0], sizes = [8, 255], strides = [1, 1]} : vector<8x256xf32> to vector<8x255xf32>
    %186 = tpu.concatenate %184, %185 in 1 : vector<8x1xf32>, vector<8x255xf32> -> vector<8x256xf32>
    %cst_39 = arith.constant 0.000000e+00 : f32
    %187 = vector.broadcast %cst_39 : f32 to vector<8x256xf32>
    %188 = arith.select %18, %186, %187 : vector<8x256xi1>, vector<8x256xf32>
    %189 = vector.extract_strided_slice %57 {offsets = [0, 1], sizes = [8, 255], strides = [1, 1]} : vector<8x256xf32> to vector<8x255xf32>
    %190 = vector.extract_strided_slice %57 {offsets = [0, 0], sizes = [8, 1], strides = [1, 1]} : vector<8x256xf32> to vector<8x1xf32>
    %191 = tpu.concatenate %189, %190 in 1 : vector<8x255xf32>, vector<8x1xf32> -> vector<8x256xf32>
    %cst_40 = arith.constant 0.000000e+00 : f32
    %192 = vector.broadcast %cst_40 : f32 to vector<8x256xf32>
    %193 = arith.select %20, %191, %192 : vector<8x256xi1>, vector<8x256xf32>
    %194 = arith.addf %188, %57 : vector<8x256xf32>
    %195 = arith.addf %194, %193 : vector<8x256xf32>
    %196 = vector.extract_strided_slice %195 {offsets = [0, 240], sizes = [8, 16], strides = [1, 1]} : vector<8x256xf32> to vector<8x16xf32>
    %197 = vector.extract_strided_slice %195 {offsets = [0, 0], sizes = [8, 240], strides = [1, 1]} : vector<8x256xf32> to vector<8x240xf32>
    %198 = tpu.concatenate %196, %197 in 1 : vector<8x16xf32>, vector<8x240xf32> -> vector<8x256xf32>
    %cst_41 = arith.constant 0.000000e+00 : f32
    %199 = vector.broadcast %cst_41 : f32 to vector<8x256xf32>
    %200 = arith.select %22, %198, %199 : vector<8x256xi1>, vector<8x256xf32>
    %201 = vector.extract_strided_slice %195 {offsets = [0, 16], sizes = [8, 240], strides = [1, 1]} : vector<8x256xf32> to vector<8x240xf32>
    %202 = vector.extract_strided_slice %195 {offsets = [0, 0], sizes = [8, 16], strides = [1, 1]} : vector<8x256xf32> to vector<8x16xf32>
    %203 = tpu.concatenate %201, %202 in 1 : vector<8x240xf32>, vector<8x16xf32> -> vector<8x256xf32>
    %cst_42 = arith.constant 0.000000e+00 : f32
    %204 = vector.broadcast %cst_42 : f32 to vector<8x256xf32>
    %205 = arith.select %24, %203, %204 : vector<8x256xi1>, vector<8x256xf32>
    %206 = arith.addf %200, %195 : vector<8x256xf32>
    %207 = arith.addf %206, %205 : vector<8x256xf32>
    %208 = arith.mulf %207, %41 : vector<8x256xf32>
    %c10 = arith.constant 10 : index
    %209 = memref.load %arg1[%c10] : memref<14xf32, #tpu.memory_space<smem>>
    %210 = vector.broadcast %209 : f32 to vector<8x256xf32>
    %211 = arith.mulf %210, %208 : vector<8x256xf32>
    %212 = arith.addf %183, %211 : vector<8x256xf32>
    %213 = vector.extract_strided_slice %88 {offsets = [0, 255], sizes = [8, 1], strides = [1, 1]} : vector<8x256xf32> to vector<8x1xf32>
    %214 = vector.extract_strided_slice %88 {offsets = [0, 0], sizes = [8, 255], strides = [1, 1]} : vector<8x256xf32> to vector<8x255xf32>
    %215 = tpu.concatenate %213, %214 in 1 : vector<8x1xf32>, vector<8x255xf32> -> vector<8x256xf32>
    %cst_43 = arith.constant -3.40282347E+38 : f32
    %216 = vector.broadcast %cst_43 : f32 to vector<8x256xf32>
    %217 = arith.select %18, %215, %216 : vector<8x256xi1>, vector<8x256xf32>
    %218 = vector.extract_strided_slice %88 {offsets = [0, 1], sizes = [8, 255], strides = [1, 1]} : vector<8x256xf32> to vector<8x255xf32>
    %219 = vector.extract_strided_slice %88 {offsets = [0, 0], sizes = [8, 1], strides = [1, 1]} : vector<8x256xf32> to vector<8x1xf32>
    %220 = tpu.concatenate %218, %219 in 1 : vector<8x255xf32>, vector<8x1xf32> -> vector<8x256xf32>
    %cst_44 = arith.constant -3.40282347E+38 : f32
    %221 = vector.broadcast %cst_44 : f32 to vector<8x256xf32>
    %222 = arith.select %20, %220, %221 : vector<8x256xi1>, vector<8x256xf32>
    %223 = arith.maximumf %217, %88 : vector<8x256xf32>
    %224 = arith.maximumf %223, %222 : vector<8x256xf32>
    %225 = vector.extract_strided_slice %224 {offsets = [0, 240], sizes = [8, 16], strides = [1, 1]} : vector<8x256xf32> to vector<8x16xf32>
    %226 = vector.extract_strided_slice %224 {offsets = [0, 0], sizes = [8, 240], strides = [1, 1]} : vector<8x256xf32> to vector<8x240xf32>
    %227 = tpu.concatenate %225, %226 in 1 : vector<8x16xf32>, vector<8x240xf32> -> vector<8x256xf32>
    %cst_45 = arith.constant -3.40282347E+38 : f32
    %228 = vector.broadcast %cst_45 : f32 to vector<8x256xf32>
    %229 = arith.select %22, %227, %228 : vector<8x256xi1>, vector<8x256xf32>
    %230 = vector.extract_strided_slice %224 {offsets = [0, 16], sizes = [8, 240], strides = [1, 1]} : vector<8x256xf32> to vector<8x240xf32>
    %231 = vector.extract_strided_slice %224 {offsets = [0, 0], sizes = [8, 16], strides = [1, 1]} : vector<8x256xf32> to vector<8x16xf32>
    %232 = tpu.concatenate %230, %231 in 1 : vector<8x240xf32>, vector<8x16xf32> -> vector<8x256xf32>
    %cst_46 = arith.constant -3.40282347E+38 : f32
    %233 = vector.broadcast %cst_46 : f32 to vector<8x256xf32>
    %234 = arith.select %24, %232, %233 : vector<8x256xi1>, vector<8x256xf32>
    %235 = arith.maximumf %229, %224 : vector<8x256xf32>
    %236 = arith.maximumf %235, %234 : vector<8x256xf32>
    %c11 = arith.constant 11 : index
    %237 = memref.load %arg1[%c11] : memref<14xf32, #tpu.memory_space<smem>>
    %238 = vector.broadcast %237 : f32 to vector<8x256xf32>
    %239 = arith.mulf %238, %236 : vector<8x256xf32>
    %240 = arith.addf %212, %239 : vector<8x256xf32>
    %c13 = arith.constant 13 : index
    %241 = memref.load %arg1[%c13] : memref<14xf32, #tpu.memory_space<smem>>
    %242 = vector.broadcast %241 : f32 to vector<8x256xf32>
    %243 = arith.mulf %242, %180 : vector<8x256xf32>
    %244 = arith.addf %240, %243 : vector<8x256xf32>
    %245 = vector.shape_cast %88 : vector<8x256xf32> to vector<1x8x256xf32>
    %246 = vector.shape_cast %120 : vector<8x256xf32> to vector<1x8x256xf32>
    %247 = vector.shape_cast %180 : vector<8x256xf32> to vector<1x8x256xf32>
    %248 = vector.shape_cast %244 : vector<8x256xf32> to vector<1x8x256xf32>
    %249 = tpu.concatenate %245, %246, %247, %248 in 1 : vector<1x8x256xf32>, vector<1x8x256xf32>, vector<1x8x256xf32>, vector<1x8x256xf32> -> vector<1x32x256xf32>
    %c0_47 = arith.constant 0 : index
    %c0_48 = arith.constant 0 : index
    %c0_49 = arith.constant 0 : index
    %250 = vector.load %arg6[%c0_47, %c0_48, %c0_49] : memref<1x32x256xf32, #tpu.memory_space<vmem>>, vector<1x32x256xf32>
    tpu.vector_store %arg6[%c0_47, %c0_48, %c0_49], %249 {strides = array<i32>} : memref<1x32x256xf32, #tpu.memory_space<vmem>>, vector<1x32x256xf32>,
    return
  }
  func.func @transform_0(%arg0: i32) -> i32 {
    %c0_i32 = arith.constant 0 : i32
    %c0_i32_0 = arith.constant 0 : i32
    return %c0_i32 : i32
  }
  func.func @transform_1(%arg0: i32) -> (i32, i32, i32) {
    %c0_i32 = arith.constant 0 : i32
    %c0_i32_0 = arith.constant 0 : i32
    %c0_i32_1 = arith.constant 0 : i32
    return %arg0, %c0_i32, %c0_i32_0 : i32, i32, i32
  }
  func.func @transform_2(%arg0: i32) -> (i32, i32, i32) {
    %c0_i32 = arith.constant 0 : i32
    %c0_i32_0 = arith.constant 0 : i32
    %c0_i32_1 = arith.constant 0 : i32
    return %arg0, %c0_i32, %c0_i32_0 : i32, i32, i32
  }
  func.func @transform_3(%arg0: i32) -> (i32, i32) {
    %c0_i32 = arith.constant 0 : i32
    %c0_i32_0 = arith.constant 0 : i32
    %c0_i32_1 = arith.constant 0 : i32
    return %c0_i32, %c0_i32_0 : i32, i32
  }
  func.func @transform_4(%arg0: i32) -> (i32, i32) {
    %c0_i32 = arith.constant 0 : i32
    %c0_i32_0 = arith.constant 0 : i32
    %c0_i32_1 = arith.constant 0 : i32
    return %c0_i32, %c0_i32_0 : i32, i32
  }
  func.func @transform_5(%arg0: i32) -> (i32, i32, i32) {
    %c0_i32 = arith.constant 0 : i32
    %c0_i32_0 = arith.constant 0 : i32
    %c0_i32_1 = arith.constant 0 : i32
    return %arg0, %c0_i32, %c0_i32_0 : i32, i32, i32
  }
}

</mosaic_0001>

<llo_original>
// kernel: sd_cell_forward.1
$region0: #{sd_cell_forward.1}
  #allocation0 [shape = 'u32[]', space=smem, size = 0x4, offset = 0x4, fixed_abs, tag = 'smem constant byte address 0x4 - core index']
  #allocation1 [shape = 'u32[72,128]{1,0:T(1,128)}', space=vmem, size = 0x9000, scoped, tag = 'internal scratch']
  %s0 = inlined_call_operand.vmem [shape: f32[14], index: 0, kind: input, shape index: {}]
  %s1 = inlined_call_operand.vmem [shape: f32[2,16,256], index: 1, kind: input, shape index: {}]
  %s2 = inlined_call_operand.vmem [shape: f32[2,16,256], index: 2, kind: input, shape index: {}]
  %s3 = inlined_call_operand.vmem [shape: f32[8,16], index: 3, kind: input, shape index: {}]
  %s4 = inlined_call_operand.vmem [shape: f32[8,16], index: 4, kind: input, shape index: {}]
  %s5 = inlined_call_operand.vmem [shape: f32[2,32,256], index: 5, kind: output, shape index: {}]
  %s6 = sld [smem:[#allocation0]]
  $region57: #{sd_cell_forward.1} parent=0
    _
  %s8 = ssub.s32 1, %s6
  %s9 = scalar_select 0, %s8, %s6
  $region1: #{sd_cell_forward.1} parent=0
    #allocation2 [shape = 'u8[512]{0}', space=smem, size = 0x200, scoped, tag = 'input window, operand 0, single buffered']
    #allocation3 [shape = 's32[2]{0}', space=sflag, size = 0x8, scoped, tag = 'scoped memory for sd_cell_forward.1']
    %10 = vsyncpa [#allocation3], 0
    loop: start=0, step=1, limit=4
    $region2: #{sd_cell_forward.1} parent=1 // loop_pre_header
      _
    $region3: #{sd_cell_forward.1} parent=1 // loop_header
      %s12 = sphi 0, %s16
      %p13 = scmp.ge.s32.totalorder %s12, 4
      %s20 = sphi 0, %s20
      %s22 = sphi 0, %s20
      %s23 = sphi 0, %s22
      %s37 = sphi 0, %s23
      %s43 = sphi 0, %s45
      %s46 = sphi 0, %s43
      %s47 = sphi 0, %s46
      %s63 = sphi 0, %s47
      %s69 = sphi 0, %s71
      %s72 = sphi 0, %s69
      %s73 = sphi 0, %s72
      %s89 = sphi 0, %s73
      %s93 = sphi 0, %s93
      %s95 = sphi 0, %s93
      %s96 = sphi 0, %s95
      %s110 = sphi 0, %s96
      %s114 = sphi 0, %s114
      %s116 = sphi 0, %s114
      %s117 = sphi 0, %s116
      %s131 = sphi 0, %s117
      %s137 = sphi 0, %s139
      %s140 = sphi 0, %s137
      %s141 = sphi 0, %s140
      %s157 = sphi 0, %s141
    $region4: #{sd_cell_forward.1} parent=1 // loop_header_branch
      %15 = sbr.rel (%p13) target = $region8
    $region5: #{sd_cell_forward.1} parent=1 // loop_body
      %s17 = ssub.s32 %s12, 1
      %s18 = ssub.s32 %s12, 2
      %s19 = sadd.s32 %s12, 1
      %s21 = sadd.s32 %s20, 1
      %p24 = scmp.eq.s32.totalorder %s12, 1
      %p25 = scmp.ne.s32.totalorder %s20, %s22
      %p26 = scmp.eq.s32.totalorder %s12, 0
      %p27 = por %p25, %p26
      %p28 = scmp.ne.s32.totalorder %s20, %s22
      %p29 = scmp.eq.s32.totalorder %s17, 1
      %p30 = por %p28, %p29
      %p31 = scmp.ne.s32.totalorder %s22, %s23
      %p32 = scmp.eq.s32.totalorder %s17, 0
      %p33 = por %p31, %p32
      %p34 = scmp.ne.s32.totalorder %s22, %s23
      %p35 = scmp.eq.s32.totalorder %s18, 1
      %p36 = por %p34, %p35
      %p38 = scmp.ne.s32.totalorder %s23, %s37
      %p39 = scmp.eq.s32.totalorder %s18, 0
      %p40 = por %p38, %p39
      %s41 = ssub.s32 %s12, %s19
      %p42 = scmp.eq.s32.totalorder %s41, 0
      %s44 = sadd.s32 %s43, 1
      %s45 = scalar_select %p42, %s43, %s44
      %p48 = pneg %p42
      %p49 = scmp.eq.s32.totalorder %s12, 1
      %p50 = por %p48, %p49
      %p51 = scmp.ne.s32.totalorder %s43, %s46
      %p52 = scmp.eq.s32.totalorder %s12, 0
      %p53 = por %p51, %p52
      %p54 = scmp.ne.s32.totalorder %s43, %s46
      %p55 = scmp.eq.s32.totalorder %s17, 1
      %p56 = por %p54, %p55
      %p57 = scmp.ne.s32.totalorder %s46, %s47
      %p58 = scmp.eq.s32.totalorder %s17, 0
      %p59 = por %p57, %p58
      %p60 = scmp.ne.s32.totalorder %s46, %s47
      %p61 = scmp.eq.s32.totalorder %s18, 1
      %p62 = por %p60, %p61
      %p64 = scmp.ne.s32.totalorder %s47, %s63
      %p65 = scmp.eq.s32.totalorder %s18, 0
      %p66 = por %p64, %p65
      %s67 = ssub.s32 %s12, %s19
      %p68 = scmp.eq.s32.totalorder %s67, 0
      %s70 = sadd.s32 %s69, 1
      %s71 = scalar_select %p68, %s69, %s70
      %p74 = pneg %p68
      %p75 = scmp.eq.s32.totalorder %s12, 1
      %p76 = por %p74, %p75
      %p77 = scmp.ne.s32.totalorder %s69, %s72
      %p78 = scmp.eq.s32.totalorder %s12, 0
      %p79 = por %p77, %p78
      %p80 = scmp.ne.s32.totalorder %s69, %s72
      %p81 = scmp.eq.s32.totalorder %s17, 1
      %p82 = por %p80, %p81
      %p83 = scmp.ne.s32.totalorder %s72, %s73
      %p84 = scmp.eq.s32.totalorder %s17, 0
      %p85 = por %p83, %p84
      %p86 = scmp.ne.s32.totalorder %s72, %s73
      %p87 = scmp.eq.s32.totalorder %s18, 1
      %p88 = por %p86, %p87
      %p90 = scmp.ne.s32.totalorder %s73, %s89
      %p91 = scmp.eq.s32.totalorder %s18, 0
      %p92 = por %p90, %p91
      %s94 = sadd.s32 %s93, 1
      %p97 = scmp.eq.s32.totalorder %s12, 1
      %p98 = scmp.ne.s32.totalorder %s93, %s95
      %p99 = scmp.eq.s32.totalorder %s12, 0
      %p100 = por %p98, %p99
      %p101 = scmp.ne.s32.totalorder %s93, %s95
      %p102 = scmp.eq.s32.totalorder %s17, 1
      %p103 = por %p101, %p102
      %p104 = scmp.ne.s32.totalorder %s95, %s96
      %p105 = scmp.eq.s32.totalorder %s17, 0
      %p106 = por %p104, %p105
      %p107 = scmp.ne.s32.totalorder %s95, %s96
      %p108 = scmp.eq.s32.totalorder %s18, 1
      %p109 = por %p107, %p108
      %p111 = scmp.ne.s32.totalorder %s96, %s110
      %p112 = scmp.eq.s32.totalorder %s18, 0
      %p113 = por %p111, %p112
      %s115 = sadd.s32 %s114, 1
      %p118 = scmp.eq.s32.totalorder %s12, 1
      %p119 = scmp.ne.s32.totalorder %s114, %s116
      %p120 = scmp.eq.s32.totalorder %s12, 0
      %p121 = por %p119, %p120
      %p122 = scmp.ne.s32.totalorder %s114, %s116
      %p123 = scmp.eq.s32.totalorder %s17, 1
      %p124 = por %p122, %p123
      %p125 = scmp.ne.s32.totalorder %s116, %s117
      %p126 = scmp.eq.s32.totalorder %s17, 0
      %p127 = por %p125, %p126
      %p128 = scmp.ne.s32.totalorder %s116, %s117
      %p129 = scmp.eq.s32.totalorder %s18, 1
      %p130 = por %p128, %p129
      %p132 = scmp.ne.s32.totalorder %s117, %s131
      %p133 = scmp.eq.s32.totalorder %s18, 0
      %p134 = por %p132, %p133
      %s135 = ssub.s32 %s12, %s19
      %p136 = scmp.eq.s32.totalorder %s135, 0
      %s138 = sadd.s32 %s137, 1
      %s139 = scalar_select %p136, %s137, %s138
      %p142 = pneg %p136
      %p143 = scmp.eq.s32.totalorder %s12, 1
      %p144 = por %p142, %p143
      %p145 = scmp.ne.s32.totalorder %s137, %s140
      %p146 = scmp.eq.s32.totalorder %s12, 0
      %p147 = por %p145, %p146
      %p148 = scmp.ne.s32.totalorder %s137, %s140
      %p149 = scmp.eq.s32.totalorder %s17, 1
      %p150 = por %p148, %p149
      %p151 = scmp.ne.s32.totalorder %s140, %s141
      %p152 = scmp.eq.s32.totalorder %s17, 0
      %p153 = por %p151, %p152
      %p154 = scmp.ne.s32.totalorder %s140, %s141
      %p155 = scmp.eq.s32.totalorder %s18, 1
      %p156 = por %p154, %p155
      %p158 = scmp.ne.s32.totalorder %s141, %s157
      %p159 = scmp.eq.s32.totalorder %s18, 0
      %p160 = por %p158, %p159
      %p161 = scmp.le.s32.totalorder 1, %s12
      %p162 = scmp.lt.s32.totalorder %s12, 3
      %p163 = pnand %p161, %p162
      %p164 = pneg %p163
      // Predicated region
      $region9: #{sd_cell_forward.1} parent=5 // pred_check
        _
      $region10: #{sd_cell_forward.1} parent=5 // pred_check_branch
        %166 = sbr.rel (%p163) target = $region12
      $region11: #{sd_cell_forward.1} parent=5 // pred_region
        %s167 = ssub.s32 %s12, 1
        // Predicated region
        $region13: #{sd_cell_forward.1} parent=11 // pred_check
          %p168 = pneg %p33
        $region14: #{sd_cell_forward.1} parent=11 // pred_check_branch
          %170 = sbr.rel (%p168) target = $region16
        $region15: #{sd_cell_forward.1} parent=11 // pred_region
          %172 = vsyncadd [#allocation3], 0
          %s174 = sshll.u32 %s0, 4
          %s175 = int_to_ptr.vmem [resolvable:$true] %s174
          %177 = dma.vmem_to_smem %s175, 16, [#allocation2], [#allocation3]
        $region16: #{sd_cell_forward.1} parent=11 // pred_fallthru
          _
        // Predicated region
        $region17: #{sd_cell_forward.1} parent=11 // pred_check
          %p178 = pneg %p106
        $region18: #{sd_cell_forward.1} parent=11 // pred_check_branch
          %180 = sbr.rel (%p178) target = $region20
        $region19: #{sd_cell_forward.1} parent=11 // pred_region
          _
        $region20: #{sd_cell_forward.1} parent=11 // pred_fallthru
          _
        // Predicated region
        $region21: #{sd_cell_forward.1} parent=11 // pred_check
          %p181 = pneg %p127
        $region22: #{sd_cell_forward.1} parent=11 // pred_check_branch
          %183 = sbr.rel (%p181) target = $region24
        $region23: #{sd_cell_forward.1} parent=11 // pred_region
          _
        $region24: #{sd_cell_forward.1} parent=11 // pred_fallthru
          _
      $region12: #{sd_cell_forward.1} parent=5 // pred_fallthru
        _
      %p184 = scmp.lt.s32.totalorder %s12, 2
      // Predicated region
      $region25: #{sd_cell_forward.1} parent=5 // pred_check
        %p185 = pneg %p184
      $region26: #{sd_cell_forward.1} parent=5 // pred_check_branch
        %187 = sbr.rel (%p185) target = $region28
      $region27: #{sd_cell_forward.1} parent=5 // pred_region
        // Predicated region
        $region29: #{sd_cell_forward.1} parent=27 // pred_check
          %p188 = pneg %p53
        $region30: #{sd_cell_forward.1} parent=27 // pred_check_branch
          %190 = sbr.rel (%p188) target = $region32
        $region31: #{sd_cell_forward.1} parent=27 // pred_region
          %p191 = scmp.lt.s32.totalorder %s12, 1
          %s192 = scalar_select %p191, %s12, 1
          %s193 = smul.addr %s192, 4
          %s194 = smul.addr %s193, 8
          %s195 = scalar_lea.vmem %s1, %s194
        $region32: #{sd_cell_forward.1} parent=27 // pred_fallthru
          _
        // Predicated region
        $region33: #{sd_cell_forward.1} parent=27 // pred_check
          %p196 = pneg %p79
        $region34: #{sd_cell_forward.1} parent=27 // pred_check_branch
          %198 = sbr.rel (%p196) target = $region36
        $region35: #{sd_cell_forward.1} parent=27 // pred_region
          %p199 = scmp.lt.s32.totalorder %s12, 1
          %s200 = scalar_select %p199, %s12, 1
          %s201 = smul.addr %s200, 4
          %s202 = smul.addr %s201, 8
          %s203 = scalar_lea.vmem %s2, %s202
        $region36: #{sd_cell_forward.1} parent=27 // pred_fallthru
          _
      $region28: #{sd_cell_forward.1} parent=5 // pred_fallthru
        _
      %p204 = scmp.le.s32.totalorder 1, %s12
      %p205 = scmp.lt.s32.totalorder %s12, 3
      %p206 = pnand %p204, %p205
      %p207 = pneg %p206
      // Predicated region
      $region37: #{sd_cell_forward.1} parent=5 // pred_check
        _
      $region38: #{sd_cell_forward.1} parent=5 // pred_check_branch
        %209 = sbr.rel (%p206) target = $region40
      $region39: #{sd_cell_forward.1} parent=5 // pred_region
        %s210 = ssub.s32 %s12, 1
        // Predicated region
        $region41: #{sd_cell_forward.1} parent=39 // pred_check
          %p211 = pneg %p33
        $region42: #{sd_cell_forward.1} parent=39 // pred_check_branch
          %213 = sbr.rel (%p211) target = $region44
        $region43: #{sd_cell_forward.1} parent=39 // pred_region
          %215 = dma.done [#allocation3], 16
        $region44: #{sd_cell_forward.1} parent=39 // pred_fallthru
          _
        %216 = sfence
        %p217 = pneg %p33
        %p218 = pneg %p30
        %p219 = scmp.lt.s32.totalorder %s17, 1
        %s220 = scalar_select %p219, %s17, 1
        %s221 = smul.addr %s220, 4
        %s222 = smul.addr %s221, 8
        %s223 = scalar_lea.vmem %s1, %s222
        %p224 = pneg %p59
        %p225 = pneg %p56
        %p226 = scmp.lt.s32.totalorder %s17, 1
        %s227 = scalar_select %p226, %s17, 1
        %s228 = smul.addr %s227, 4
        %s229 = smul.addr %s228, 8
        %s230 = scalar_lea.vmem %s2, %s229
        %p231 = pneg %p85
        %p232 = pneg %p82
        %p233 = pneg %p106
        %p234 = pneg %p103
        %p235 = pneg %p127
        %p236 = pneg %p124
        %p237 = pneg %p153
        %p238 = pneg %p150
        %p239 = scmp.lt.s32.totalorder %s17, 1
        %s240 = scalar_select %p239, %s17, 1
        %s241 = smul.addr %s240, 8
        %s242 = smul.addr %s241, 8
        %s243 = scalar_lea.vmem %s5, %s242
        %p244 = scmp.lt.s32.totalorder %s17, 1
        %s245 = scalar_select %p244, %s17, 1
        %s246 = smul.addr %s245, 4
        %s247 = smul.addr %s246, 8
        %s248 = scalar_lea.vmem %s1, %s247
        %p249 = scmp.lt.s32.totalorder %s17, 1
        %s250 = scalar_select %p249, %s17, 1
        %s251 = smul.addr %s250, 4
        %s252 = smul.addr %s251, 8
        %s253 = scalar_lea.vmem %s2, %s252
        %p254 = scmp.lt.s32.totalorder %s17, 1
        %s255 = scalar_select %p254, %s17, 1
        %s256 = smul.addr %s255, 8
        %s257 = smul.addr %s256, 8
        %s258 = scalar_lea.vmem %s5, %s257
        %v259 = vlaneseq
        %v260 = vand.u32 %v259, 127
        %v261 = vadd.s32 %v260, 128
        %vm262 = vcmp.lt.s32.totalorder %v260, 0
        %v263 = vsub.s32 0, %v260
        %v264 = vsel %vm262, %v263, %v260
        %v265 = vshrl.u32 %v264, 4
        %v266 = vand.u32 %v264, 15
        %v267 = vsub.s32 0, %v266
        %v268 = vsel %vm262, %v267, %v266
        %vm269 = vcmp.lt.s32.totalorder %v261, 0
        %v270 = vsub.s32 0, %v261
        %v271 = vsel %vm269, %v270, %v261
        %v272 = vshrl.u32 %v271, 4
        %v273 = vand.u32 %v271, 15
        %v274 = vsub.s32 0, %v273
        %v275 = vsel %vm269, %v274, %v273
        %vm276 = vcmp.ne.s32.totalorder %v268, 0
        %vm277 = vcmp.ne.s32.totalorder %v275, 0
        %vm278 = vcmp.lt.s32.totalorder %v268, 0
        %vm279 = vcmp.lt.s32.totalorder %v275, 0
        %vm280 = vmand %vm278, %vm276
        %vm281 = vmand %vm279, %vm277
        %v282 = vadd.s32 %v268, 16
        %v283 = vadd.s32 %v275, 16
        %v284 = vsel %vm280, %v282, %v268
        %v285 = vsel %vm281, %v283, %v275
        %vm286 = vcmp.gt.s32.totalorder %v284, 0
        %vm287 = vcmp.gt.s32.totalorder %v285, 0
        %vm288 = vcmp.lt.s32.totalorder %v284, 15
        %vm289 = vcmp.lt.s32.totalorder %v285, 15
        %vm290 = vcmp.ge.s32.totalorder %v260, 16
        %vm291 = vcmp.ge.s32.totalorder %v261, 16
        %vm292 = vcmp.lt.s32.totalorder %v260, 240
        %vm293 = vcmp.lt.s32.totalorder %v261, 240
        %v294 = vsel %vm286, 1, 0
        %v295 = vsel %vm287, 1, 0
        %v296 = vcvt.s32.f32 %v294
        %v297 = vcvt.s32.f32 %v295
        %v298 = vadd.f32 %v296, 1.0
        %v299 = vadd.f32 %v297, 1.0
        %v300 = vsel %vm288, 1, 0
        %v301 = vsel %vm289, 1, 0
        %v302 = vcvt.s32.f32 %v300
        %v303 = vcvt.s32.f32 %v301
        %v304 = vadd.f32 %v298, %v302
        %v305 = vadd.f32 %v299, %v303
        %v306 = vsel %vm290, 1, 0
        %v307 = vsel %vm291, 1, 0
        %v308 = vcvt.s32.f32 %v306
        %v309 = vcvt.s32.f32 %v307
        %v310 = vadd.f32 %v308, 1.0
        %v311 = vadd.f32 %v309, 1.0
        %v312 = vsel %vm292, 1, 0
        %v313 = vsel %vm293, 1, 0
        %v314 = vcvt.s32.f32 %v312
        %v315 = vcvt.s32.f32 %v313
        %v316 = vadd.f32 %v310, %v314
        %v317 = vadd.f32 %v311, %v315
        %v318 = vmul.f32 %v304, %v316
        %v319 = vmul.f32 %v305, %v317
        %v320 = vrcp.pop %v318
        %v321 = vmul.f32 %v318, %v320
        %v322 = vsub.f32 1.0, %v321
        %v323 = vmul.f32 %v320, %v322
        %v324 = vadd.f32 %v320, %v323
        %vm325 = vweird.f32 %v318
        %vm326 = vweird.f32 %v320
        %vm327 = vmor %vm325, %vm326
        %v328 = vsel %vm327, %v320, %v324
        %v329 = vand.u32 2147483647, %v318
        %vm330 = vcmp.eq.f32.partialorder %v329, 8.507059e+37
        %v331 = vand.u32 %v318, 2147483648
        %v332 = vor.u32 1.1754944e-38, %v331
        %v333 = vsel %vm330, %v332, %v328
        %v334 = vmul.f32 1.0, %v333
        %v335 = vrcp.pop %v319
        %v336 = vmul.f32 %v319, %v335
        %v337 = vsub.f32 1.0, %v336
        %v338 = vmul.f32 %v335, %v337
        %v339 = vadd.f32 %v335, %v338
        %vm340 = vweird.f32 %v319
        %vm341 = vweird.f32 %v335
        %vm342 = vmor %vm340, %vm341
        %v343 = vsel %vm342, %v335, %v339
        %v344 = vand.u32 2147483647, %v319
        %vm345 = vcmp.eq.f32.partialorder %v344, 8.507059e+37
        %v346 = vand.u32 %v319, 2147483648
        %v347 = vor.u32 1.1754944e-38, %v346
        %v348 = vsel %vm345, %v347, %v343
        %v349 = vmul.f32 1.0, %v348
        %v350 = vld [vmem:[%s248] sm:$0xff]
        %v351 = vld [vmem:[%s248 + $0x8] sm:$0xff]
        %v352 = vld [vmem:[%s248 + $0x10] sm:$0xff]
        %v353 = vld [vmem:[%s248 + $0x18] sm:$0xff]
        %v354 = vmax.f32 %v350, 0.0
        %v355 = vmax.f32 %v351, 0.0
        %v356 = vmax.f32 %v352, 0.0
        %v357 = vmax.f32 %v353, 0.0
        %v358 = vld [vmem:[%s3] sm:$0xff]
        %vm359 = vcmask 130048
        %v361 = vsel %vm359, %v358, 0
        %363 = vmatpush.msra.mxu0 0.0
        %364 = vmatpush.msra.mxu0 0.0
        %365 = vmatpush.msra.mxu0 0.0
        %366 = vmatpush.msra.mxu0 0.0
        %367 = vmatpush.msra.mxu0 0.0
        %368 = vmatpush.msra.mxu0 0.0
        %369 = vmatpush.msra.mxu0 0.0
        %370 = vmatpush.msra.mxu0 0.0
        %371 = vmatpush.msra.mxu0 0.0
        %372 = vmatpush.msra.mxu0 0.0
        %373 = vmatpush.msra.mxu0 0.0
        %374 = vmatpush.msra.mxu0 0.0
        %375 = vmatpush.msra.mxu0 0.0
        %376 = vmatpush.msra.mxu0 0.0
        %377 = vmatpush.msra.mxu0 %v356
        %378 = vmatpush.msra.mxu0 %v354
        %379 = vmatmul.f32.gmra.mxu0 %v361
        %v380 = vpop.f32.mrf.mxu0
        %v381 = vadd.f32 0.0, %v380
        %382 = vdwg.mxu0
        %383 = vmatpush.msra.mxu0 0.0
        %384 = vmatpush.msra.mxu0 0.0
        %385 = vmatpush.msra.mxu0 0.0
        %386 = vmatpush.msra.mxu0 0.0
        %387 = vmatpush.msra.mxu0 0.0
        %388 = vmatpush.msra.mxu0 0.0
        %389 = vmatpush.msra.mxu0 0.0
        %390 = vmatpush.msra.mxu0 0.0
        %391 = vmatpush.msra.mxu0 0.0
        %392 = vmatpush.msra.mxu0 0.0
        %393 = vmatpush.msra.mxu0 0.0
        %394 = vmatpush.msra.mxu0 0.0
        %395 = vmatpush.msra.mxu0 0.0
        %396 = vmatpush.msra.mxu0 0.0
        %397 = vmatpush.msra.mxu0 %v357
        %398 = vmatpush.msra.mxu0 %v355
        %399 = vmatmul.f32.gmra.mxu0 %v361
        %v400 = vpop.f32.mrf.mxu0
        %v401 = vadd.f32 0.0, %v400
        %402 = vdwg.mxu0
        %v403 = vmul.f32 %v381, 0.999995
        %v404 = vmul.f32 %v401, 0.999995
        %v405 = vld [vmem:[%s253] sm:$0xff]
        %v406 = vld [vmem:[%s253 + $0x8] sm:$0xff]
        %v407 = vld [vmem:[%s253 + $0x10] sm:$0xff]
        %v408 = vld [vmem:[%s253 + $0x18] sm:$0xff]
        %v409 = vmax.f32 %v405, 0.0
        %v410 = vmax.f32 %v406, 0.0
        %v411 = vmax.f32 %v407, 0.0
        %v412 = vmax.f32 %v408, 0.0
        %v413 = vld [vmem:[%s4] sm:$0xff]
        %v415 = vsel %vm359, %v413, 0
        %417 = vmatpush.msra.mxu0 0.0
        %418 = vmatpush.msra.mxu0 0.0
        %419 = vmatpush.msra.mxu0 0.0
        %420 = vmatpush.msra.mxu0 0.0
        %421 = vmatpush.msra.mxu0 0.0
        %422 = vmatpush.msra.mxu0 0.0
        %423 = vmatpush.msra.mxu0 0.0
        %424 = vmatpush.msra.mxu0 0.0
        %425 = vmatpush.msra.mxu0 0.0
        %426 = vmatpush.msra.mxu0 0.0
        %427 = vmatpush.msra.mxu0 0.0
        %428 = vmatpush.msra.mxu0 0.0
        %429 = vmatpush.msra.mxu0 0.0
        %430 = vmatpush.msra.mxu0 0.0
        %431 = vmatpush.msra.mxu0 %v411
        %432 = vmatpush.msra.mxu0 %v409
        %433 = vmatmul.f32.gmra.mxu0 %v415
        %v434 = vpop.f32.mrf.mxu0
        %v435 = vadd.f32 0.0, %v434
        %436 = vdwg.mxu0
        %437 = vmatpush.msra.mxu0 0.0
        %438 = vmatpush.msra.mxu0 0.0
        %439 = vmatpush.msra.mxu0 0.0
        %440 = vmatpush.msra.mxu0 0.0
        %441 = vmatpush.msra.mxu0 0.0
        %442 = vmatpush.msra.mxu0 0.0
        %443 = vmatpush.msra.mxu0 0.0
        %444 = vmatpush.msra.mxu0 0.0
        %445 = vmatpush.msra.mxu0 0.0
        %446 = vmatpush.msra.mxu0 0.0
        %447 = vmatpush.msra.mxu0 0.0
        %448 = vmatpush.msra.mxu0 0.0
        %449 = vmatpush.msra.mxu0 0.0
        %450 = vmatpush.msra.mxu0 0.0
        %451 = vmatpush.msra.mxu0 %v412
        %452 = vmatpush.msra.mxu0 %v410
        %453 = vmatmul.f32.gmra.mxu0 %v415
        %v454 = vpop.f32.mrf.mxu0
        %v455 = vadd.f32 0.0, %v454
        %456 = vdwg.mxu0
        %v457 = vmul.f32 %v435, 0.999995
        %v458 = vmul.f32 %v455, 0.999995
        %s459 = sld [smem:[#allocation2]]
        %v460 = vstv %s459
        %v461 = vmul.f32 %v460, %v403
        %v462 = vmul.f32 %v460, %v404
        %464 = vrot.lane.b32.xlu0 %v458, 1
        %v465 = vpop.permute.xlu0 %464
        %468 = vrot.lane.b32.xlu0 %v457, 1
        %v469 = vpop.permute.xlu0 %468
        %vm470 = vcmask 7168
        %v471 = vsel %vm470, %v469, %v465
        %v474 = vsel %vm470, %v465, %v469
        %v475 = vsel %vm286, %v474, -3.4028235e+38
        %v476 = vsel %vm287, %v471, -3.4028235e+38
        %477 = vrot.lane.b32.xlu0 %v457, 127
        %v478 = vpop.permute.xlu0 %477
        %479 = vrot.lane.b32.xlu0 %v458, 127
        %v480 = vpop.permute.xlu0 %479
        %vm481 = vcmask 1039360
        %v482 = vsel %vm481, %v478, %v480
        %v486 = vsel %vm481, %v480, %v478
        %v487 = vsel %vm288, %v482, -3.4028235e+38
        %v488 = vsel %vm289, %v486, -3.4028235e+38
        %v489 = vmax.f32 %v475, %v457
        %v490 = vmax.f32 %v476, %v458
        %v491 = vmax.f32 %v489, %v487
        %v492 = vmax.f32 %v490, %v488
        %494 = vrot.lane.b32.xlu0 %v492, 16
        %v495 = vpop.permute.xlu0 %494
        %498 = vrot.lane.b32.xlu0 %v491, 16
        %v499 = vpop.permute.xlu0 %498
        %v500 = vsel %vm359, %v499, %v495
        %v503 = vsel %vm359, %v495, %v499
        %v504 = vsel %vm290, %v503, -3.4028235e+38
        %v505 = vsel %vm291, %v500, -3.4028235e+38
        %506 = vrot.lane.b32.xlu0 %v491, 112
        %v507 = vpop.permute.xlu0 %506
        %508 = vrot.lane.b32.xlu0 %v492, 112
        %v509 = vpop.permute.xlu0 %508
        %vm510 = vcmask 916480
        %v511 = vsel %vm510, %v507, %v509
        %v515 = vsel %vm510, %v509, %v507
        %v516 = vsel %vm292, %v511, -3.4028235e+38
        %v517 = vsel %vm293, %v515, -3.4028235e+38
        %v518 = vmax.f32 %v504, %v491
        %v519 = vmax.f32 %v505, %v492
        %v520 = vmax.f32 %v518, %v516
        %v521 = vmax.f32 %v519, %v517
        %s522 = sld [smem:[#allocation2 + $0x1]]
        %v523 = vstv %s522
        %v524 = vmul.f32 %v523, %v520
        %v525 = vmul.f32 %v523, %v521
        %v526 = vadd.f32 %v461, %v524
        %v527 = vadd.f32 %v462, %v525
        %529 = vrot.lane.b32.xlu0 %v404, 1
        %v530 = vpop.permute.xlu0 %529
        %533 = vrot.lane.b32.xlu0 %v403, 1
        %v534 = vpop.permute.xlu0 %533
        %v535 = vsel %vm470, %v534, %v530
        %v538 = vsel %vm470, %v530, %v534
        %v539 = vsel %vm286, %v538, 0.0
        %v540 = vsel %vm287, %v535, 0.0
        %541 = vrot.lane.b32.xlu0 %v403, 127
        %v542 = vpop.permute.xlu0 %541
        %543 = vrot.lane.b32.xlu0 %v404, 127
        %v544 = vpop.permute.xlu0 %543
        %v545 = vsel %vm481, %v542, %v544
        %v549 = vsel %vm481, %v544, %v542
        %v550 = vsel %vm288, %v545, 0.0
        %v551 = vsel %vm289, %v549, 0.0
        %v552 = vadd.f32 %v539, %v403
        %v553 = vadd.f32 %v540, %v404
        %v554 = vadd.f32 %v552, %v550
        %v555 = vadd.f32 %v553, %v551
        %557 = vrot.lane.b32.xlu0 %v555, 16
        %v558 = vpop.permute.xlu0 %557
        %561 = vrot.lane.b32.xlu0 %v554, 16
        %v562 = vpop.permute.xlu0 %561
        %v563 = vsel %vm359, %v562, %v558
        %v566 = vsel %vm359, %v558, %v562
        %v567 = vsel %vm290, %v566, 0.0
        %v568 = vsel %vm291, %v563, 0.0
        %569 = vrot.lane.b32.xlu0 %v554, 112
        %v570 = vpop.permute.xlu0 %569
        %571 = vrot.lane.b32.xlu0 %v555, 112
        %v572 = vpop.permute.xlu0 %571
        %v573 = vsel %vm510, %v570, %v572
        %v577 = vsel %vm510, %v572, %v570
        %v578 = vsel %vm292, %v573, 0.0
        %v579 = vsel %vm293, %v577, 0.0
        %v580 = vadd.f32 %v567, %v554
        %v581 = vadd.f32 %v568, %v555
        %v582 = vadd.f32 %v580, %v578
        %v583 = vadd.f32 %v581, %v579
        %v584 = vmul.f32 %v582, %v334
        %v585 = vmul.f32 %v583, %v349
        %s586 = sld [smem:[#allocation2 + $0x2]]
        %v587 = vstv %s586
        %v588 = vmul.f32 %v587, %v584
        %v589 = vmul.f32 %v587, %v585
        %s590 = sld [smem:[#allocation2 + $0x3]]
        %v591 = vstv %s590
        %v592 = vmul.f32 %v591, %v457
        %v593 = vmul.f32 %v591, %v458
        %v594 = vadd.f32 %v588, %v592
        %v595 = vadd.f32 %v589, %v593
        %v596 = vsel %vm286, %v538, -3.4028235e+38
        %v597 = vsel %vm287, %v535, -3.4028235e+38
        %v598 = vsel %vm288, %v545, -3.4028235e+38
        %v599 = vsel %vm289, %v549, -3.4028235e+38
        %v600 = vmax.f32 %v596, %v403
        %v601 = vmax.f32 %v597, %v404
        %v602 = vmax.f32 %v600, %v598
        %v603 = vmax.f32 %v601, %v599
        %605 = vrot.lane.b32.xlu0 %v603, 16
        %v606 = vpop.permute.xlu0 %605
        %609 = vrot.lane.b32.xlu0 %v602, 16
        %v610 = vpop.permute.xlu0 %609
        %v611 = vsel %vm359, %v610, %v606
        %v614 = vsel %vm359, %v606, %v610
        %v615 = vsel %vm290, %v614, -3.4028235e+38
        %v616 = vsel %vm291, %v611, -3.4028235e+38
        %617 = vrot.lane.b32.xlu0 %v602, 112
        %v618 = vpop.permute.xlu0 %617
        %619 = vrot.lane.b32.xlu0 %v603, 112
        %v620 = vpop.permute.xlu0 %619
        %v621 = vsel %vm510, %v618, %v620
        %v625 = vsel %vm510, %v620, %v618
        %v626 = vsel %vm292, %v621, -3.4028235e+38
        %v627 = vsel %vm293, %v625, -3.4028235e+38
        %v628 = vmax.f32 %v615, %v602
        %v629 = vmax.f32 %v616, %v603
        %v630 = vmax.f32 %v628, %v626
        %v631 = vmax.f32 %v629, %v627
        %s632 = sld [smem:[#allocation2 + $0x5]]
        %v633 = vstv %s632
        %v634 = vmul.f32 %v633, %v630
        %v635 = vmul.f32 %v633, %v631
        %s636 = sld [smem:[#allocation2 + $0x6]]
        %v637 = vstv %s636
        %v638 = vmul.f32 %v637, %v457
        %v639 = vmul.f32 %v637, %v458
        %v640 = vadd.f32 %v634, %v638
        %v641 = vadd.f32 %v635, %v639
        %643 = vrot.lane.b32.xlu0 %v527, 1
        %v644 = vpop.permute.xlu0 %643
        %647 = vrot.lane.b32.xlu0 %v526, 1
        %v648 = vpop.permute.xlu0 %647
        %v649 = vsel %vm470, %v648, %v644
        %v652 = vsel %vm470, %v644, %v648
        %v653 = vsel %vm286, %v652, 0.0
        %v654 = vsel %vm287, %v649, 0.0
        %655 = vrot.lane.b32.xlu0 %v526, 127
        %v656 = vpop.permute.xlu0 %655
        %657 = vrot.lane.b32.xlu0 %v527, 127
        %v658 = vpop.permute.xlu0 %657
        %v659 = vsel %vm481, %v656, %v658
        %v663 = vsel %vm481, %v658, %v656
        %v664 = vsel %vm288, %v659, 0.0
        %v665 = vsel %vm289, %v663, 0.0
        %v666 = vadd.f32 %v653, %v526
        %v667 = vadd.f32 %v654, %v527
        %v668 = vadd.f32 %v666, %v664
        %v669 = vadd.f32 %v667, %v665
        %671 = vrot.lane.b32.xlu0 %v669, 16
        %v672 = vpop.permute.xlu0 %671
        %675 = vrot.lane.b32.xlu0 %v668, 16
        %v676 = vpop.permute.xlu0 %675
        %v677 = vsel %vm359, %v676, %v672
        %v680 = vsel %vm359, %v672, %v676
        %v681 = vsel %vm290, %v680, 0.0
        %v682 = vsel %vm291, %v677, 0.0
        %683 = vrot.lane.b32.xlu0 %v668, 112
        %v684 = vpop.permute.xlu0 %683
        %685 = vrot.lane.b32.xlu0 %v669, 112
        %v686 = vpop.permute.xlu0 %685
        %v687 = vsel %vm510, %v684, %v686
        %v691 = vsel %vm510, %v686, %v684
        %v692 = vsel %vm292, %v687, 0.0
        %v693 = vsel %vm293, %v691, 0.0
        %v694 = vadd.f32 %v681, %v668
        %v695 = vadd.f32 %v682, %v669
        %v696 = vadd.f32 %v694, %v692
        %v697 = vadd.f32 %v695, %v693
        %v698 = vmul.f32 %v696, %v334
        %v699 = vmul.f32 %v697, %v349
        %s700 = sld [smem:[#allocation2 + $0x7]]
        %v701 = vstv %s700
        %v702 = vmul.f32 %v701, %v698
        %v703 = vmul.f32 %v701, %v699
        %v704 = vadd.f32 %v640, %v702
        %v705 = vadd.f32 %v641, %v703
        %s706 = sld [smem:[#allocation2 + $0x9]]
        %v707 = vstv %s706
        %v708 = vmul.f32 %v707, %v403
        %v709 = vmul.f32 %v707, %v404
        %v710 = vsel %vm286, %v474, 0.0
        %v711 = vsel %vm287, %v471, 0.0
        %v712 = vsel %vm288, %v482, 0.0
        %v713 = vsel %vm289, %v486, 0.0
        %v714 = vadd.f32 %v710, %v457
        %v715 = vadd.f32 %v711, %v458
        %v716 = vadd.f32 %v714, %v712
        %v717 = vadd.f32 %v715, %v713
        %719 = vrot.lane.b32.xlu0 %v717, 16
        %v720 = vpop.permute.xlu0 %719
        %723 = vrot.lane.b32.xlu0 %v716, 16
        %v724 = vpop.permute.xlu0 %723
        %v725 = vsel %vm359, %v724, %v720
        %v728 = vsel %vm359, %v720, %v724
        %v729 = vsel %vm290, %v728, 0.0
        %v730 = vsel %vm291, %v725, 0.0
        %731 = vrot.lane.b32.xlu0 %v716, 112
        %v732 = vpop.permute.xlu0 %731
        %733 = vrot.lane.b32.xlu0 %v717, 112
        %v734 = vpop.permute.xlu0 %733
        %v735 = vsel %vm510, %v732, %v734
        %v739 = vsel %vm510, %v734, %v732
        %v740 = vsel %vm292, %v735, 0.0
        %v741 = vsel %vm293, %v739, 0.0
        %v742 = vadd.f32 %v729, %v716
        %v743 = vadd.f32 %v730, %v717
        %v744 = vadd.f32 %v742, %v740
        %v745 = vadd.f32 %v743, %v741
        %v746 = vmul.f32 %v744, %v334
        %v747 = vmul.f32 %v745, %v349
        %s748 = sld [smem:[#allocation2 + $0xa]]
        %v749 = vstv %s748
        %v750 = vmul.f32 %v749, %v746
        %v751 = vmul.f32 %v749, %v747
        %v752 = vadd.f32 %v708, %v750
        %v753 = vadd.f32 %v709, %v751
        %v754 = vsel %vm286, %v652, -3.4028235e+38
        %v755 = vsel %vm287, %v649, -3.4028235e+38
        %v756 = vsel %vm288, %v659, -3.4028235e+38
        %v757 = vsel %vm289, %v663, -3.4028235e+38
        %v758 = vmax.f32 %v754, %v526
        %v759 = vmax.f32 %v755, %v527
        %v760 = vmax.f32 %v758, %v756
        %v761 = vmax.f32 %v759, %v757
        %763 = vrot.lane.b32.xlu0 %v761, 16
        %v764 = vpop.permute.xlu0 %763
        %767 = vrot.lane.b32.xlu0 %v760, 16
        %v768 = vpop.permute.xlu0 %767
        %v769 = vsel %vm359, %v768, %v764
        %v772 = vsel %vm359, %v764, %v768
        %v773 = vsel %vm290, %v772, -3.4028235e+38
        %v774 = vsel %vm291, %v769, -3.4028235e+38
        %775 = vrot.lane.b32.xlu0 %v760, 112
        %v776 = vpop.permute.xlu0 %775
        %777 = vrot.lane.b32.xlu0 %v761, 112
        %v778 = vpop.permute.xlu0 %777
        %v779 = vsel %vm510, %v776, %v778
        %v783 = vsel %vm510, %v778, %v776
        %v784 = vsel %vm292, %v779, -3.4028235e+38
        %v785 = vsel %vm293, %v783, -3.4028235e+38
        %v786 = vmax.f32 %v773, %v760
        %v787 = vmax.f32 %v774, %v761
        %v788 = vmax.f32 %v786, %v784
        %v789 = vmax.f32 %v787, %v785
        %s790 = sld [smem:[#allocation2 + $0xb]]
        %v791 = vstv %s790
        %v792 = vmul.f32 %v791, %v788
        %v793 = vmul.f32 %v791, %v789
        %v794 = vadd.f32 %v752, %v792
        %v795 = vadd.f32 %v753, %v793
        %s796 = sld [smem:[#allocation2 + $0xd]]
        %v797 = vstv %s796
        %v798 = vmul.f32 %v797, %v704
        %v799 = vmul.f32 %v797, %v705
        %v800 = vadd.f32 %v794, %v798
        %v801 = vadd.f32 %v795, %v799
        %802 = vst [vmem:[%s258] sm:$0xff] %v526
        %803 = vst [vmem:[%s258 + $0x8] sm:$0xff] %v527
        %804 = vst [vmem:[%s258 + $0x10] sm:$0xff] %v594
        %805 = vst [vmem:[%s258 + $0x18] sm:$0xff] %v595
        %806 = vst [vmem:[%s258 + $0x20] sm:$0xff] %v704
        %807 = vst [vmem:[%s258 + $0x28] sm:$0xff] %v705
        %808 = vst [vmem:[%s258 + $0x30] sm:$0xff] %v800
        %809 = vst [vmem:[%s258 + $0x38] sm:$0xff] %v801
        %p810 = scmp.lt.s32.totalorder %s17, 1
        %s811 = scalar_select %p810, %s17, 1
        %s812 = smul.addr %s811, 8
        %s813 = smul.addr %s812, 8
        %s814 = scalar_lea.vmem %s5, %s813
        // Predicated region
        $region45: #{sd_cell_forward.1} parent=39 // pred_check
          %p815 = pneg %p150
        $region46: #{sd_cell_forward.1} parent=39 // pred_check_branch
          %817 = sbr.rel (%p815) target = $region48
        $region47: #{sd_cell_forward.1} parent=39 // pred_region
          _
        $region48: #{sd_cell_forward.1} parent=39 // pred_fallthru
          _
      $region40: #{sd_cell_forward.1} parent=5 // pred_fallthru
        _
      %p818 = scmp.le.s32.totalorder 2, %s12
      // Predicated region
      $region49: #{sd_cell_forward.1} parent=5 // pred_check
        %p819 = pneg %p818
      $region50: #{sd_cell_forward.1} parent=5 // pred_check_branch
        %821 = sbr.rel (%p819) target = $region52
      $region51: #{sd_cell_forward.1} parent=5 // pred_region
        %s822 = ssub.s32 %s12, 2
        // Predicated region
        $region53: #{sd_cell_forward.1} parent=51 // pred_check
          %p823 = pneg %p156
        $region54: #{sd_cell_forward.1} parent=51 // pred_check_branch
          %825 = sbr.rel (%p823) target = $region56
        $region55: #{sd_cell_forward.1} parent=51 // pred_region
          %p826 = scmp.lt.s32.totalorder %s18, 1
          %s827 = scalar_select %p826, %s18, 1
          %s828 = smul.addr %s827, 8
          %s829 = smul.addr %s828, 8
          %s830 = scalar_lea.vmem %s5, %s829
        $region56: #{sd_cell_forward.1} parent=51 // pred_fallthru
          _
      $region52: #{sd_cell_forward.1} parent=5 // pred_fallthru
        _
    $region6: #{sd_cell_forward.1} parent=1 // loop_footer
      %s16 = sadd.s32 1, %s12
    $region7: #{sd_cell_forward.1} parent=1 // loop_footer_branch
      %11 = sbr.rel target = $region3
    $region8: #{sd_cell_forward.1} parent=1 // loop_exit
      _
    %831 = vsyncpa [#allocation3], 1
    %s832 = scalar_lea.sflag [#allocation3], 1
    %833 = vsyncpa %s832, 1

</llo_original>
